<compile_context>
chip_gen: v6e
topology: v6e:2x2x1
jax: 0.10.0
libtpu: 0.0.40
codegen_flags: <defaults>
</compile_context>

<pallas_src>
import functools

import jax
import jax.numpy as jnp
from jax import lax
from jax.experimental import pallas as pl
from jax.experimental.pallas import tpu as pltpu


def _round_up(x: int, m: int) -> int:
    return (x + m - 1) // m * m


# ---------------------------------------------------------------------------
# Stage 1: token-row gather (manual DMA) + positional add.
# ---------------------------------------------------------------------------
def _embed_kernel(tok_ids_ref, tok_emb_hbm, pos_ref, h_ref, rows, sems):
    b = pl.program_id(0)
    sp = rows.shape[0]  # rows per grid step (static)

    @pl.loop(0, sp)
    def _start(i):
        tid = tok_ids_ref[b * sp + i]
        pltpu.make_async_copy(
            tok_emb_hbm.at[pl.ds(tid, 1)], rows.at[pl.ds(i, 1)], sems.at[i]
        ).start()

    @pl.loop(0, sp)
    def _wait(i):
        pltpu.make_async_copy(
            tok_emb_hbm.at[pl.ds(0, 1)], rows.at[pl.ds(i, 1)], sems.at[i]
        ).wait()

    # Add (f32) and emit bf16 for the output-head GEMM.
    h_ref[...] = (rows[...] + pos_ref[...]).astype(h_ref.dtype)


def _gather_embeddings(tok_ids, tok_emb_p, pos_emb_p, B, Sp, Ep):
    grid_spec = pltpu.PrefetchScalarGridSpec(
        num_scalar_prefetch=1,
        grid=(B,),
        in_specs=[
            pl.BlockSpec(memory_space=pl.ANY),                # (V, Ep) stays in HBM
            pl.BlockSpec((Sp, Ep), lambda b, tids: (0, 0)),   # contiguous pos rows, resident
        ],
        out_specs=pl.BlockSpec((None, Sp, Ep), lambda b, tids: (b, 0, 0)),
        scratch_shapes=[
            pltpu.VMEM((Sp, Ep), tok_emb_p.dtype),
            pltpu.SemaphoreType.DMA((Sp,)),
        ],
    )
    return pl.pallas_call(
        _embed_kernel,
        out_shape=jax.ShapeDtypeStruct((B, Sp, Ep), jnp.bfloat16),
        grid_spec=grid_spec,
        compiler_params=pltpu.CompilerParams(dimension_semantics=("parallel",)),
    )(tok_ids, tok_emb_p, pos_emb_p)


# ---------------------------------------------------------------------------
# Stage 2: output head GEMM.  Vocab is the OUTER grid axis so the W tile is
# loaded from HBM exactly once; h tiles (small) are re-streamed.
# ---------------------------------------------------------------------------
def _head_kernel(h_ref, w_ref, out_ref):
    # bf16 x bf16 -> f32 accumulation on the MXU.  W kept in (V, E) layout, so
    # contract the E axis of both operands (no transpose in the wrapper).
    out_ref[...] = lax.dot_general(
        h_ref[...], w_ref[...],
        dimension_numbers=(((1,), (1,)), ((), ())),
        preferred_element_type=jnp.float32,
    )


def _output_head(h, w_p, tm, tn):
    mp, ep = h.shape
    vp, _ = w_p.shape
    grid = (vp // tn, mp // tm)  # vocab outer -> W block index constant over inner M loop
    cost = pl.CostEstimate(
        flops=2 * mp * ep * vp,
        transcendentals=0,
        bytes_accessed=mp * ep * 2 + vp * ep * 2 + mp * vp * 4,
    )
    # Double-buffered bf16 input tiles + double-buffered f32 output tile (+slack).
    need = 2 * (tm * ep * 2 + tn * ep * 2) + 2 * tm * tn * 4
    vmem_limit = int(min(56 * 1024 * 1024, max(2 * need, 16 * 1024 * 1024)))
    return pl.pallas_call(
        _head_kernel,
        out_shape=jax.ShapeDtypeStruct((mp, vp), jnp.float32),
        grid_spec=pltpu.PrefetchScalarGridSpec(
            num_scalar_prefetch=0,
            grid=grid,
            in_specs=[
                pl.BlockSpec((tm, ep), lambda n, m: (m, 0)),  # h tile (bf16)
                pl.BlockSpec((tn, ep), lambda n, m: (n, 0)),  # W tile: DMA'd once total
            ],
            out_specs=pl.BlockSpec((tm, tn), lambda n, m: (m, n)),
        ),
        compiler_params=pltpu.CompilerParams(
            dimension_semantics=("parallel", "arbitrary"),
            vmem_limit_bytes=vmem_limit,
        ),
        cost_estimate=cost,
    )(h, w_p)


# ---------------------------------------------------------------------------
# One-time parameter preparation (hoisted out of the per-call forward).
# ---------------------------------------------------------------------------
def prepare_params(tok_emb, pos_emb, w_head, *, tn_max=1024):
    V, E = tok_emb.shape
    C = pos_emb.shape[0]
    Ep = _round_up(E, 128)
    Cp = _round_up(C, 8)
    Vp = _round_up(V, 128)
    TN = min(tn_max, Vp)
    Vp = _round_up(Vp, TN)
    f32 = jnp.float32
    tok_emb_p = jnp.zeros((V, Ep), f32).at[:, :E].set(tok_emb.astype(f32))
    pos_emb_p = jnp.zeros((Cp, Ep), f32).at[:C, :E].set(pos_emb.astype(f32))
    # Native nn.Linear (V, E) layout: pad + cast to bf16, no transpose.
    w_p = jnp.zeros((Vp, Ep), jnp.bfloat16).at[:V, :E].set(w_head.astype(jnp.bfloat16))
    return dict(tok_emb_p=tok_emb_p, pos_emb_p=pos_emb_p, w_p=w_p,
                vocab_size=V, context_length=C, tn=TN)


# ---------------------------------------------------------------------------
# Forward wrapper.
# ---------------------------------------------------------------------------
def dummy_gpt_forward(x, tok_emb_p, pos_emb_p, w_p, *, vocab_size, context_length, tn):
    """x: (B, S) int32 token ids -> (B, S, vocab_size) float32 logits."""
    B, S = x.shape
    if S > context_length:
        raise ValueError(f"seq_len {S} exceeds context_length {context_length}")
    V = vocab_size
    Ep = tok_emb_p.shape[1]
    Vp = w_p.shape[0]
    Sp = _round_up(S, 8)

    # Flat token-id vector for SMEM scalar prefetch (pad rows gather row 0).
    # TODO(synk): PyTorch nn.Embedding raises on out-of-range ids; we clamp instead.
    ids = jnp.clip(x.astype(jnp.int32), 0, V - 1)
    ids = jnp.pad(ids, ((0, 0), (0, Sp - S)))
    tok_ids = ids.reshape(B * Sp)

    h3 = _gather_embeddings(tok_ids, tok_emb_p, pos_emb_p, B, Sp, Ep)  # (B,Sp,Ep) bf16
    # TODO(synk): nn.Dropout is identity in eval mode; DummyTransformerBlock and
    # DummyLayerNorm are identities, so h feeds the output head directly.

    M = B * Sp
    TM = M if M <= 512 else 256
    Mp = _round_up(M, TM)
    h = h3.reshape(M, Ep)
    if Mp != M:
        h = jnp.pad(h, ((0, Mp - M), (0, 0)))

    logits_p = _output_head(h, w_p, TM, tn)                            # (Mp, Vp) f32
    return logits_p[:M].reshape(B, Sp, Vp)[:, :S, :V]


def reference_forward(x, tok_emb, pos_emb, w_head):
    """Pure-JAX f32 reference for correctness checking."""
    S = x.shape[1]
    h = tok_emb[x] + pos_emb[:S][None, :, :]
    return jnp.einsum("bse,ve->bsv", h, w_head, precision=lax.Precision.HIGHEST)


if __name__ == "__main__":
    cfg = dict(vocab_size=128, context_length=16, emb_dim=32,
               drop_rate=0.1, n_layers=2)
    B, S = 2, 8

    key = jax.random.PRNGKey(0)
    k_tok, k_pos, k_w, k_x = jax.random.split(key, 4)

    tok_emb = jax.random.normal(k_tok, (cfg["vocab_size"], cfg["emb_dim"]),
                                dtype=jnp.float32) * 0.02
    pos_emb = jax.random.normal(k_pos, (cfg["context_length"], cfg["emb_dim"]),
                                dtype=jnp.float32) * 0.02
    # nn.Linear(emb_dim, vocab_size, bias=False) stores weight as (vocab, emb).
    w_head = jax.random.normal(k_w, (cfg["vocab_size"], cfg["emb_dim"]),
                               dtype=jnp.float32) * 0.02
    x = jax.random.randint(k_x, (B, S), 0, cfg["vocab_size"], dtype=jnp.int32)

    params = prepare_params(tok_emb, pos_emb, w_head)
    fwd = jax.jit(functools.partial(
        dummy_gpt_forward,
        vocab_size=params["vocab_size"],
        context_length=params["context_length"],
        tn=params["tn"]))

    logits = jax.block_until_ready(
        fwd(x, params["tok_emb_p"], params["pos_emb_p"], params["w_p"]))
    ref = reference_forward(x, tok_emb, pos_emb, w_head)

    assert logits.shape == (B, S, cfg["vocab_size"])
    max_err = float(jnp.max(jnp.abs(logits - ref)))
    # bf16 MXU path (f32 accumulate): relaxed tolerance vs the f32 reference.
    assert jnp.allclose(logits, ref, atol=2e-3, rtol=5e-2), f"max abs err {max_err}"

    print("KERNEL_OK")
</pallas_src>

<mosaic_0001>
module attributes {stable_mosaic.version = 11 : i64} {
  func.func @_embed_kernel(%arg0: i32, %arg1: memref<16xi32, #tpu.memory_space<smem>>, %arg2: memref<128x128xf32, #tpu.memory_space<any>>, %arg3: memref<8x128xf32, #tpu.memory_space<vmem>>, %arg4: memref<1x8x128xbf16, #tpu.memory_space<vmem>>, %arg5: memref<8x128xf32, #tpu.memory_space<vmem>>, %arg6: memref<8x!tpu.dma_semaphore, #tpu.memory_space<semaphore_mem>>) attributes {dimension_semantics = [#tpu.dimension_semantics<parallel>], iteration_bounds = array<i64: 2>, scalar_prefetch = 1 : i64, scratch_operands = 2 : i64, tpu.core_type = #tpu.core_type<tc>, window_params = [{}, {transform_indices = @transform_1, window_bounds = array<i64: 8, 128>}, {transform_indices = @transform_2, window_bounds = array<i64: 1, 8, 128>}]} {
    %c0_i32 = arith.constant 0 : i32
    %c8_i32 = arith.constant 8 : i32
    %0 = arith.addi %c0_i32, %c8_i32 : i32
    %c1_i32 = arith.constant 1 : i32
    scf.for %arg7 = %c0_i32 to %0 step %c1_i32  : i32 {
      %c1_i32_11 = arith.constant 1 : i32
      %9 = arith.muli %arg7, %c1_i32_11 : i32
      %c0_i32_12 = arith.constant 0 : i32
      %10 = arith.addi %c0_i32_12, %9 : i32
      %c8_i32_13 = arith.constant 8 : i32
      %11 = arith.muli %arg0, %c8_i32_13 : i32
      %12 = arith.addi %11, %10 : i32
      %13 = arith.index_cast %12 : i32 to index
      %14 = memref.load %arg1[%13] : memref<16xi32, #tpu.memory_space<smem>>
      %c0_i32_14 = arith.constant 0 : i32
      %15 = tpu.memref_slice %arg2[%14, %c0_i32_14] : memref<128x128xf32, #tpu.memory_space<any>> -> memref<1x128xf32, #tpu.memory_space<any>>
      %c0_i32_15 = arith.constant 0 : i32
      %16 = tpu.memref_slice %arg5[%10, %c0_i32_15] : memref<8x128xf32, #tpu.memory_space<vmem>> -> memref<1x128xf32, #tpu.memory_space<vmem>>
      %17 = tpu.memref_slice %arg6[%10] : memref<8x!tpu.dma_semaphore, #tpu.memory_space<semaphore_mem>> -> memref<1x!tpu.dma_semaphore, #tpu.memory_space<semaphore_mem>>
      %18 = tpu.memref_squeeze %17 : memref<1x!tpu.dma_semaphore, #tpu.memory_space<semaphore_mem>> -> memref<!tpu.dma_semaphore, #tpu.memory_space<semaphore_mem>>
      tpu.enqueue_dma source(%15 : memref<1x128xf32, #tpu.memory_space<any>>) target(%16 : memref<1x128xf32, #tpu.memory_space<vmem>>) target_semaphore(%18 : memref<!tpu.dma_semaphore, #tpu.memory_space<semaphore_mem>>)
    }
    %c8_i32_0 = arith.constant 8 : i32
    %c0_i32_1 = arith.constant 0 : i32
    %c8_i32_2 = arith.constant 8 : i32
    %1 = arith.addi %c0_i32_1, %c8_i32_2 : i32
    %c1_i32_3 = arith.constant 1 : i32
    scf.for %arg7 = %c0_i32_1 to %1 step %c1_i32_3  : i32 {
      %c1_i32_11 = arith.constant 1 : i32
      %9 = arith.muli %arg7, %c1_i32_11 : i32
      %c0_i32_12 = arith.constant 0 : i32
      %10 = arith.addi %c0_i32_12, %9 : i32
      %c0_i32_13 = arith.constant 0 : i32
      %c0_i32_14 = arith.constant 0 : i32
      %11 = tpu.memref_slice %arg2[%c0_i32_13, %c0_i32_14] : memref<128x128xf32, #tpu.memory_space<any>> -> memref<1x128xf32, #tpu.memory_space<any>>
      %c0_i32_15 = arith.constant 0 : i32
      %12 = tpu.memref_slice %arg5[%10, %c0_i32_15] : memref<8x128xf32, #tpu.memory_space<vmem>> -> memref<1x128xf32, #tpu.memory_space<vmem>>
      %13 = tpu.memref_slice %arg6[%10] : memref<8x!tpu.dma_semaphore, #tpu.memory_space<semaphore_mem>> -> memref<1x!tpu.dma_semaphore, #tpu.memory_space<semaphore_mem>>
      %14 = tpu.memref_squeeze %13 : memref<1x!tpu.dma_semaphore, #tpu.memory_space<semaphore_mem>> -> memref<!tpu.dma_semaphore, #tpu.memory_space<semaphore_mem>>
      tpu.wait_dma2 semaphore(%14 : memref<!tpu.dma_semaphore, #tpu.memory_space<semaphore_mem>>) src(%11 : memref<1x128xf32, #tpu.memory_space<any>>) dst(%12 : memref<1x128xf32, #tpu.memory_space<vmem>>)
    }
    %c8_i32_4 = arith.constant 8 : i32
    %c0 = arith.constant 0 : index
    %c0_5 = arith.constant 0 : index
    %2 = vector.load %arg5[%c0, %c0_5] : memref<8x128xf32, #tpu.memory_space<vmem>>, vector<8x128xf32>
    %c0_6 = arith.constant 0 : index
    %c0_7 = arith.constant 0 : index
    %3 = vector.load %arg3[%c0_6, %c0_7] : memref<8x128xf32, #tpu.memory_space<vmem>>, vector<8x128xf32>
    %4 = arith.addf %2, %3 : vector<8x128xf32>
    %5 = arith.truncf %4 : vector<8x128xf32> to vector<8x128xbf16>
    %c0_8 = arith.constant 0 : index
    %c0_9 = arith.constant 0 : index
    %c0_10 = arith.constant 0 : index
    %6 = vector.load %arg4[%c0_8, %c0_9, %c0_10] : memref<1x8x128xbf16, #tpu.memory_space<vmem>>, vector<1x8x128xbf16>
    %7 = vector.shape_cast %6 : vector<1x8x128xbf16> to vector<8x128xbf16>
    %8 = vector.shape_cast %5 : vector<8x128xbf16> to vector<1x8x128xbf16>
    tpu.vector_store %arg4[%c0_8, %c0_9, %c0_10], %8 {strides = array<i32>} : memref<1x8x128xbf16, #tpu.memory_space<vmem>>, vector<1x8x128xbf16>,
    return
  }
  func.func @transform_1(%arg0: i32, %arg1: memref<16xi32, #tpu.memory_space<smem>>) -> (i32, i32) {
    %c0_i32 = arith.constant 0 : i32
    %c0_i32_0 = arith.constant 0 : i32
    %c0_i32_1 = arith.constant 0 : i32
    return %c0_i32, %c0_i32_0 : i32, i32
  }
  func.func @transform_2(%arg0: i32, %arg1: memref<16xi32, #tpu.memory_space<smem>>) -> (i32, i32, i32) {
    %c0_i32 = arith.constant 0 : i32
    %c0_i32_0 = arith.constant 0 : i32
    %c0_i32_1 = arith.constant 0 : i32
    return %arg0, %c0_i32, %c0_i32_0 : i32, i32, i32
  }
}

module attributes {stable_mosaic.version = 11 : i64} {
  func.func @_head_kernel(%arg0: i32, %arg1: i32, %arg2: memref<16x128xbf16, #tpu.memory_space<vmem>>, %arg3: memref<128x128xbf16, #tpu.memory_space<vmem>>, %arg4: memref<16x128xf32, #tpu.memory_space<vmem>>) attributes {dimension_semantics = [#tpu.dimension_semantics<parallel>, #tpu.dimension_semantics<arbitrary>], iteration_bounds = array<i64: 1, 1>, scalar_prefetch = 0 : i64, scratch_operands = 0 : i64, tpu.core_type = #tpu.core_type<tc>, window_params = [{transform_indices = @transform_0, window_bounds = array<i64: 16, 128>}, {transform_indices = @transform_1, window_bounds = array<i64: 128, 128>}, {transform_indices = @transform_2, window_bounds = array<i64: 16, 128>}]} {
    %c0 = arith.constant 0 : index
    %c0_0 = arith.constant 0 : index
    %0 = vector.load %arg2[%c0, %c0_0] : memref<16x128xbf16, #tpu.memory_space<vmem>>, vector<16x128xbf16>
    %c0_1 = arith.constant 0 : index
    %c0_2 = arith.constant 0 : index
    %1 = vector.load %arg3[%c0_1, %c0_2] : memref<128x128xbf16, #tpu.memory_space<vmem>>, vector<128x128xbf16>
    %cst = arith.constant dense<0.000000e+00> : vector<16x128xf32>
    %2 = tpu.matmul %0, %1, %cst {dimension_numbers = #tpu.dot_dimension_numbers<[1], [1], [0], [0], [0, 0, 1, 0], [], []>} : vector<16x128xbf16>, vector<128x128xbf16>, vector<16x128xf32> -> vector<16x128xf32>
    %c0_3 = arith.constant 0 : index
    %c0_4 = arith.constant 0 : index
    %3 = vector.load %arg4[%c0_3, %c0_4] : memref<16x128xf32, #tpu.memory_space<vmem>>, vector<16x128xf32>
    tpu.vector_store %arg4[%c0_3, %c0_4], %2 {strides = array<i32>} : memref<16x128xf32, #tpu.memory_space<vmem>>, vector<16x128xf32>,
    return
  }
  func.func @transform_0(%arg0: i32, %arg1: i32) -> (i32, i32) {
    %c0_i32 = arith.constant 0 : i32
    %c0_i32_0 = arith.constant 0 : i32
    return %arg1, %c0_i32 : i32, i32
  }
  func.func @transform_1(%arg0: i32, %arg1: i32) -> (i32, i32) {
    %c0_i32 = arith.constant 0 : i32
    %c0_i32_0 = arith.constant 0 : i32
    return %arg0, %c0_i32 : i32, i32
  }
  func.func @transform_2(%arg0: i32, %arg1: i32) -> (i32, i32) {
    %c0_i32 = arith.constant 0 : i32
    return %arg1, %arg0 : i32, i32
  }
}

</mosaic_0001>

<llo_original>
// kernel: dummy_gpt_forward.2
$region0: #{dummy_gpt_forward.2}
  #allocation0 [shape = 'u32[]', space=smem, size = 0x4, offset = 0x4, fixed_abs, tag = 'smem constant byte address 0x4 - core index']
  #allocation1 [shape = 'u32[144,128]{1,0:T(1,128)}', space=vmem, size = 0x12000, scoped, tag = 'internal scratch']
  #allocation2 [shape = 'f32[8,128]{1,0:T(8,128)}', space=vmem, size = 0x1000, scoped, tag = 'scratch operand']
  #allocation3 [shape = 's32[8]{0}', space=sflag, size = 0x20, scoped, tag = 'scratch operand']
  #allocation4 [shape = 's32[1]{0}', space=sflag, size = 0x4, scoped, tag = 'scoped memory for dummy_gpt_forward.2']
  #allocation5 [shape = 'u8[512]{0}', space=smem, size = 0x200, scoped, tag = 'prefetched SMEM operand 0']
  #allocation8 [shape = 's32[]', space=sflag, size = 0x4, offset = 0, fixed_abs, tag = 'sflag constant byte address 0x0 - dummy sync flag']
  #allocation9 [shape = 's32[]', space=sflag, size = 0x4, offset = 0, fixed_abs, tag = 'sflag constant byte address 0x0 - dummy sync flag']
  #allocation10 [shape = 'u32[]', space=smem, size = 0x4, offset = 0x44, fixed_abs, tag = 'smem constant byte address 0x44 - assertion arg 0']
  #allocation11 [shape = 'u32[]', space=smem, size = 0x4, offset = 0x48, fixed_abs, tag = 'smem constant byte address 0x48 - assertion arg 1']
  %s0 = inlined_call_operand.vmem [shape: s32[16], index: 0, kind: input, shape index: {}]
  %s1 = inlined_call_operand.hbm [shape: f32[128,128], index: 1, kind: input, shape index: {}]
  %s2 = inlined_call_operand.hbm [shape: f32[16,128], index: 2, kind: input, shape index: {}]
  %s3 = inlined_call_operand.vmem [shape: bf16[2,8,128], index: 3, kind: output, shape index: {}]
  %s4 = sld [smem:[#allocation0]]
  $region59: #{dummy_gpt_forward.2} parent=0
    _
  %s6 = ssub.s32 1, %s4
  %s7 = scalar_select 0, %s6, %s4
  %s8 = sshll.u32 %s0, 4
  %s9 = int_to_ptr.vmem [resolvable:$true] %s8
  %11 = dma.vmem_to_smem %s9, 16, [#allocation5], [#allocation4]
  %12 = dma.done [#allocation4], 16
  %13 = sfence
  $region1: #{dummy_gpt_forward.2} parent=0
    #allocation6 [shape = 'u8[4096]{0}', space=vmem, size = 0x1000, scoped, tag = 'input window, operand 2, single buffered']
    #allocation7 [shape = 's32[2]{0}', space=sflag, size = 0x8, scoped, tag = 'scoped memory for dummy_gpt_forward.2']
    %14 = vsyncpa [#allocation7], 0
    loop: start=0, step=1, limit=4
    $region2: #{dummy_gpt_forward.2} parent=1 // loop_pre_header
      _
    $region3: #{dummy_gpt_forward.2} parent=1 // loop_header
      %s16 = sphi 0, %s20
      %p17 = scmp.ge.s32.totalorder %s16, 4
      %s24 = sphi 0, %s24
      %s26 = sphi 0, %s24
      %s27 = sphi 0, %s26
      %s41 = sphi 0, %s27
      %s47 = sphi 0, %s49
      %s50 = sphi 0, %s47
      %s51 = sphi 0, %s50
      %s67 = sphi 0, %s51
    $region4: #{dummy_gpt_forward.2} parent=1 // loop_header_branch
      %19 = sbr.rel (%p17) target = $region8
    $region5: #{dummy_gpt_forward.2} parent=1 // loop_body
      %s21 = ssub.s32 %s16, 1
      %s22 = ssub.s32 %s16, 2
      %s23 = sadd.s32 %s16, 1
      %s25 = sadd.s32 %s24, 1
      %p28 = scmp.eq.s32.totalorder %s16, 1
      %p29 = scmp.ne.s32.totalorder %s24, %s26
      %p30 = scmp.eq.s32.totalorder %s16, 0
      %p31 = por %p29, %p30
      %p32 = scmp.ne.s32.totalorder %s24, %s26
      %p33 = scmp.eq.s32.totalorder %s21, 1
      %p34 = por %p32, %p33
      %p35 = scmp.ne.s32.totalorder %s26, %s27
      %p36 = scmp.eq.s32.totalorder %s21, 0
      %p37 = por %p35, %p36
      %p38 = scmp.ne.s32.totalorder %s26, %s27
      %p39 = scmp.eq.s32.totalorder %s22, 1
      %p40 = por %p38, %p39
      %p42 = scmp.ne.s32.totalorder %s27, %s41
      %p43 = scmp.eq.s32.totalorder %s22, 0
      %p44 = por %p42, %p43
      %s45 = ssub.s32 %s16, %s23
      %p46 = scmp.eq.s32.totalorder %s45, 0
      %s48 = sadd.s32 %s47, 1
      %s49 = scalar_select %p46, %s47, %s48
      %p52 = pneg %p46
      %p53 = scmp.eq.s32.totalorder %s16, 1
      %p54 = por %p52, %p53
      %p55 = scmp.ne.s32.totalorder %s47, %s50
      %p56 = scmp.eq.s32.totalorder %s16, 0
      %p57 = por %p55, %p56
      %p58 = scmp.ne.s32.totalorder %s47, %s50
      %p59 = scmp.eq.s32.totalorder %s21, 1
      %p60 = por %p58, %p59
      %p61 = scmp.ne.s32.totalorder %s50, %s51
      %p62 = scmp.eq.s32.totalorder %s21, 0
      %p63 = por %p61, %p62
      %p64 = scmp.ne.s32.totalorder %s50, %s51
      %p65 = scmp.eq.s32.totalorder %s22, 1
      %p66 = por %p64, %p65
      %p68 = scmp.ne.s32.totalorder %s51, %s67
      %p69 = scmp.eq.s32.totalorder %s22, 0
      %p70 = por %p68, %p69
      %p71 = scmp.le.s32.totalorder 1, %s16
      %p72 = scmp.lt.s32.totalorder %s16, 3
      %p73 = pnand %p71, %p72
      %p74 = pneg %p73
      // Predicated region
      $region9: #{dummy_gpt_forward.2} parent=5 // pred_check
        _
      $region10: #{dummy_gpt_forward.2} parent=5 // pred_check_branch
        %76 = sbr.rel (%p73) target = $region12
      $region11: #{dummy_gpt_forward.2} parent=5 // pred_region
        %s77 = ssub.s32 %s16, 1
        // Predicated region
        $region13: #{dummy_gpt_forward.2} parent=11 // pred_check
          %p78 = pneg %p37
        $region14: #{dummy_gpt_forward.2} parent=11 // pred_check_branch
          %80 = sbr.rel (%p78) target = $region16
        $region15: #{dummy_gpt_forward.2} parent=11 // pred_region
          %s82 = ssub.s32 128, 128
          %83 = vsyncadd [#allocation7], %s82
          %s85 = sshll.u32 [#allocation6], 4
          %s86 = int_to_ptr.vmem [resolvable:$true] %s85
          %88 = dma.hbm_to_vmem [thread:$0]  %s2, 128, %s86, [#allocation7]
        $region16: #{dummy_gpt_forward.2} parent=11 // pred_fallthru
          _
      $region12: #{dummy_gpt_forward.2} parent=5 // pred_fallthru
        _
      %p89 = scmp.lt.s32.totalorder %s16, 2
      // Predicated region
      $region17: #{dummy_gpt_forward.2} parent=5 // pred_check
        %p90 = pneg %p89
      $region18: #{dummy_gpt_forward.2} parent=5 // pred_check_branch
        %92 = sbr.rel (%p90) target = $region20
      $region19: #{dummy_gpt_forward.2} parent=5 // pred_region
        _
      $region20: #{dummy_gpt_forward.2} parent=5 // pred_fallthru
        _
      %p93 = scmp.le.s32.totalorder 1, %s16
      %p94 = scmp.lt.s32.totalorder %s16, 3
      %p95 = pnand %p93, %p94
      %p96 = pneg %p95
      // Predicated region
      $region21: #{dummy_gpt_forward.2} parent=5 // pred_check
        _
      $region22: #{dummy_gpt_forward.2} parent=5 // pred_check_branch
        %98 = sbr.rel (%p95) target = $region24
      $region23: #{dummy_gpt_forward.2} parent=5 // pred_region
        %s99 = ssub.s32 %s16, 1
        // Predicated region
        $region25: #{dummy_gpt_forward.2} parent=23 // pred_check
          %p100 = pneg %p37
        $region26: #{dummy_gpt_forward.2} parent=23 // pred_check_branch
          %102 = sbr.rel (%p100) target = $region28
        $region27: #{dummy_gpt_forward.2} parent=23 // pred_region
          %103 = dma.done [#allocation7], 128
        $region28: #{dummy_gpt_forward.2} parent=23 // pred_fallthru
          _
        %p104 = pneg %p37
        %p105 = pneg %p34
        %p106 = pneg %p63
        %p107 = pneg %p60
        %p108 = scmp.lt.s32.totalorder %s21, 1
        %s109 = scalar_select %p108, %s21, 1
        %s110 = smul.addr %s109, 4
        %s111 = scalar_lea.vmem %s3, %s110
        %p112 = scmp.lt.s32.totalorder %s21, 1
        %s113 = scalar_select %p112, %s21, 1
        %s114 = smul.addr %s113, 4
        %s115 = scalar_lea.vmem %s3, %s114
        loop: start=0, step=1, limit=8
        $region29: #{dummy_gpt_forward.2} parent=23 // loop_pre_header
          _
        $region30: #{dummy_gpt_forward.2} parent=23 // loop_header
          %s117 = sphi 0, %s121
          %p118 = scmp.ge.s32.totalorder %s117, 8
        $region31: #{dummy_gpt_forward.2} parent=23 // loop_header_branch
          %120 = sbr.rel (%p118) target = $region35
        $region32: #{dummy_gpt_forward.2} parent=23 // loop_body
          %s122 = smul.u32 %s21, 8
          %s123 = sadd.s32 %s122, %s117
          %s124 = sld [smem:[#allocation5 + %s123]]
          %s125 = smul.addr %s124, 16
          %s126 = scalar_lea.hbm %s1, %s125
          %s127 = scalar_lea.vmem [#allocation2], %s117
          %s128 = scalar_lea.sflag [#allocation3], %s117
          // Predicated region
          $region36: #{dummy_gpt_forward.2} parent=32 // pred_check
            _
          $region37: #{dummy_gpt_forward.2} parent=32 // pred_check_branch
            %130 = sbr.rel target = $region39
          $region38: #{dummy_gpt_forward.2} parent=32 // pred_region
            %131 = sst [smem:[#allocation10]] [#allocation9]
            %132 = sst [smem:[#allocation11]] [#allocation8]
          $region39: #{dummy_gpt_forward.2} parent=32 // pred_fallthru
            _
          %134 = shalt.err (0)
          %s136 = sshll.u32 %s127, 4
          %s137 = int_to_ptr.vmem [resolvable:$true] %s136
          %139 = dma.hbm_to_vmem [thread:$0]  %s126, 16, %s137, %s128
        $region33: #{dummy_gpt_forward.2} parent=23 // loop_footer
          %s121 = sadd.s32 1, %s117
        $region34: #{dummy_gpt_forward.2} parent=23 // loop_footer_branch
          %116 = sbr.rel target = $region30
        $region35: #{dummy_gpt_forward.2} parent=23 // loop_exit
          _
        loop: start=0, step=1, limit=8
        $region40: #{dummy_gpt_forward.2} parent=23 // loop_pre_header
          _
        $region41: #{dummy_gpt_forward.2} parent=23 // loop_header
          %s141 = sphi 0, %s145
          %p142 = scmp.ge.s32.totalorder %s141, 8
        $region42: #{dummy_gpt_forward.2} parent=23 // loop_header_branch
          %144 = sbr.rel (%p142) target = $region46
        $region43: #{dummy_gpt_forward.2} parent=23 // loop_body
          %s146 = scalar_lea.sflag [#allocation3], %s141
          %s147 = smul.u32 1, 1
          %s148 = sshll.u32 %s147, 4
          %149 = dma.done %s146, %s148
        $region44: #{dummy_gpt_forward.2} parent=23 // loop_footer
          %s145 = sadd.s32 1, %s141
        $region45: #{dummy_gpt_forward.2} parent=23 // loop_footer_branch
          %140 = sbr.rel target = $region41
        $region46: #{dummy_gpt_forward.2} parent=23 // loop_exit
          _
        %v150 = vld [vmem:[#allocation2] sm:$0xff]
        %v151 = vld [vmem:[#allocation6] sm:$0xff]
        %v152 = vadd.f32 %v150, %v151
        %v153 = vpack.c.bf16 %v152, %v152
        %154 = vst [vmem:[%s115] sm:$0xf] %v153
        %p155 = scmp.lt.s32.totalorder %s21, 1
        %s156 = scalar_select %p155, %s21, 1
        %s157 = smul.addr %s156, 4
        %s158 = scalar_lea.vmem %s3, %s157
        // Predicated region
        $region47: #{dummy_gpt_forward.2} parent=23 // pred_check
          %p159 = pneg %p60
        $region48: #{dummy_gpt_forward.2} parent=23 // pred_check_branch
          %161 = sbr.rel (%p159) target = $region50
        $region49: #{dummy_gpt_forward.2} parent=23 // pred_region
          _
        $region50: #{dummy_gpt_forward.2} parent=23 // pred_fallthru
          _
      $region24: #{dummy_gpt_forward.2} parent=5 // pred_fallthru
        _
      %p162 = scmp.le.s32.totalorder 2, %s16
      // Predicated region
      $region51: #{dummy_gpt_forward.2} parent=5 // pred_check
        %p163 = pneg %p162
      $region52: #{dummy_gpt_forward.2} parent=5 // pred_check_branch
        %165 = sbr.rel (%p163) target = $region54
      $region53: #{dummy_gpt_forward.2} parent=5 // pred_region
        %s166 = ssub.s32 %s16, 2
        // Predicated region
        $region55: #{dummy_gpt_forward.2} parent=53 // pred_check
          %p167 = pneg %p66
        $region56: #{dummy_gpt_forward.2} parent=53 // pred_check_branch
          %169 = sbr.rel (%p167) target = $region58
        $region57: #{dummy_gpt_forward.2} parent=53 // pred_region
          %p170 = scmp.lt.s32.totalorder %s22, 1
          %s171 = scalar_select %p170, %s22, 1
          %s172 = smul.addr %s171, 4
          %s173 = scalar_lea.vmem %s3, %s172
        $region58: #{dummy_gpt_forward.2} parent=53 // pred_fallthru
          _
      $region54: #{dummy_gpt_forward.2} parent=5 // pred_fallthru
        _
    $region6: #{dummy_gpt_forward.2} parent=1 // loop_footer
      %s20 = sadd.s32 1, %s16
    $region7: #{dummy_gpt_forward.2} parent=1 // loop_footer_branch
      %15 = sbr.rel target = $region3
    $region8: #{dummy_gpt_forward.2} parent=1 // loop_exit
      _
    %174 = vsyncpa [#allocation7], 1
    %s175 = scalar_lea.sflag [#allocation7], 1
    %176 = vsyncpa %s175, 1
  %177 = vsyncmov [#allocation3]
  %s178 = vpop.sfrf %177
  %p179 = scmp.eq.s32.totalorder %s178, 0
  %p180 = pneg %p179
  %182 = shalt.err (%p180)
  %s183 = scalar_lea.sflag [#allocation3], 1
  %184 = vsyncmov %s183
  %s185 = vpop.sfrf %184
  %p186 = scmp.eq.s32.totalorder %s185, 0
  %p187 = pneg %p186
  %189 = shalt.err (%p187)
  %s190 = scalar_lea.sflag [#allocation3], 2
  %191 = vsyncmov %s190
  %s192 = vpop.sfrf %191
  %p193 = scmp.eq.s32.totalorder %s192, 0
  %p194 = pneg %p193
  %196 = shalt.err (%p194)
  %s197 = scalar_lea.sflag [#allocation3], 3
  %198 = vsyncmov %s197
  %s199 = vpop.sfrf %198
  %p200 = scmp.eq.s32.totalorder %s199, 0
  %p201 = pneg %p200
  %203 = shalt.err (%p201)
  %s204 = scalar_lea.sflag [#allocation3], 4
  %205 = vsyncmov %s204
  %s206 = vpop.sfrf %205
  %p207 = scmp.eq.s32.totalorder %s206, 0
  %p208 = pneg %p207
  %210 = shalt.err (%p208)
  %s211 = scalar_lea.sflag [#allocation3], 5
  %212 = vsyncmov %s211
  %s213 = vpop.sfrf %212
  %p214 = scmp.eq.s32.totalorder %s213, 0
  %p215 = pneg %p214
  %217 = shalt.err (%p215)
  %s218 = scalar_lea.sflag [#allocation3], 6
  %219 = vsyncmov %s218
  %s220 = vpop.sfrf %219
  %p221 = scmp.eq.s32.totalorder %s220, 0
  %p222 = pneg %p221
  %224 = shalt.err (%p222)
  %s225 = scalar_lea.sflag [#allocation3], 7
  %226 = vsyncmov %s225
  %s227 = vpop.sfrf %226
  %p228 = scmp.eq.s32.totalorder %s227, 0
  %p229 = pneg %p228
  %231 = shalt.err (%p229)

// kernel: dummy_gpt_forward.3
$region0: #{dummy_gpt_forward.3}
  #allocation0 [shape = 'u32[]', space=smem, size = 0x4, offset = 0x4, fixed_abs, tag = 'smem constant byte address 0x4 - core index']
  #allocation1 [shape = 'u32[144,128]{1,0:T(1,128)}', space=vmem, size = 0x12000, scoped, tag = 'internal scratch']
  %s0 = inlined_call_operand.vmem [shape: bf16[16,128], index: 0, kind: input, shape index: {}]
  %s1 = inlined_call_operand.vmem [shape: bf16[128,128], index: 1, kind: input, shape index: {}]
  %s2 = inlined_call_operand.hbm [shape: f32[16,128], index: 2, kind: output, shape index: {}]
  %s3 = sld [smem:[#allocation0]]
  $region18: #{dummy_gpt_forward.3} parent=0
    _
  %s5 = ssub.s32 1, %s3
  %s6 = scalar_select 0, %s5, %s3
  $region1: #{dummy_gpt_forward.3} parent=0
    #allocation2 [shape = 'u8[8192]{0}', space=vmem, size = 0x2000, scoped, tag = 'output window, operand 0, single buffered']
    #allocation3 [shape = 's32[1]{0}', space=sflag, size = 0x4, scoped, tag = 'scoped memory for dummy_gpt_forward.3']
    %7 = vsyncpa [#allocation3], 0
    // Predicated region
    $region2: #{dummy_gpt_forward.3} parent=1 // pred_check
      _
    $region3: #{dummy_gpt_forward.3} parent=1 // pred_check_branch
      %9 = sbr.rel (0) target = $region5
    $region4: #{dummy_gpt_forward.3} parent=1 // pred_region
      _
    $region5: #{dummy_gpt_forward.3} parent=1 // pred_fallthru
      _
    // Predicated region
    $region6: #{dummy_gpt_forward.3} parent=1 // pred_check
      _
    $region7: #{dummy_gpt_forward.3} parent=1 // pred_check_branch
      %11 = sbr.rel (0) target = $region9
    $region8: #{dummy_gpt_forward.3} parent=1 // pred_region
      _
    $region9: #{dummy_gpt_forward.3} parent=1 // pred_fallthru
      _
    %v13 = vld [vmem:[%s0] sm:$0xf]
    %v14 = vld [vmem:[%s0 + $0x4] sm:$0xf]
    %v15 = vld [vmem:[%s1] sm:$0xf]
    %v16 = vld [vmem:[%s1 + $0x4] sm:$0xf]
    %v17 = vld [vmem:[%s1 + $0x8] sm:$0xf]
    %v18 = vld [vmem:[%s1 + $0xc] sm:$0xf]
    %v19 = vld [vmem:[%s1 + $0x10] sm:$0xf]
    %v20 = vld [vmem:[%s1 + $0x14] sm:$0xf]
    %v21 = vld [vmem:[%s1 + $0x18] sm:$0xf]
    %v22 = vld [vmem:[%s1 + $0x1c] sm:$0xf]
    %v23 = vld [vmem:[%s1 + $0x20] sm:$0xf]
    %v24 = vld [vmem:[%s1 + $0x24] sm:$0xf]
    %v25 = vld [vmem:[%s1 + $0x28] sm:$0xf]
    %v26 = vld [vmem:[%s1 + $0x2c] sm:$0xf]
    %v27 = vld [vmem:[%s1 + $0x30] sm:$0xf]
    %v28 = vld [vmem:[%s1 + $0x34] sm:$0xf]
    %v29 = vld [vmem:[%s1 + $0x38] sm:$0xf]
    %v30 = vld [vmem:[%s1 + $0x3c] sm:$0xf]
    %v33 = vunpack.c.l.b16 %v13
    %v34 = vunpack.c.l.b16 %v14
    %v35 = vpack.c.b16 %v34, %v33
    %v53 = vunpack.c.l.b16 %v15
    %v54 = vunpack.c.l.b16 %v16
    %v55 = vunpack.c.l.b16 %v17
    %v56 = vunpack.c.l.b16 %v18
    %v57 = vunpack.c.l.b16 %v19
    %v58 = vunpack.c.l.b16 %v20
    %v59 = vunpack.c.l.b16 %v21
    %v60 = vunpack.c.l.b16 %v22
    %v61 = vunpack.c.l.b16 %v23
    %v62 = vunpack.c.l.b16 %v24
    %v63 = vunpack.c.l.b16 %v25
    %v64 = vunpack.c.l.b16 %v26
    %v65 = vunpack.c.l.b16 %v27
    %v66 = vunpack.c.l.b16 %v28
    %v67 = vunpack.c.l.b16 %v29
    %v68 = vunpack.c.l.b16 %v30
    %v69 = vpack.c.b16 %v54, %v53
    %v70 = vpack.c.b16 %v56, %v55
    %v71 = vpack.c.b16 %v58, %v57
    %v72 = vpack.c.b16 %v60, %v59
    %v73 = vpack.c.b16 %v62, %v61
    %v74 = vpack.c.b16 %v64, %v63
    %v75 = vpack.c.b16 %v66, %v65
    %v76 = vpack.c.b16 %v68, %v67
    %85 = vmatprep.subr.bf16.mxu0 0
    %86 = vmatpush1.bf16.xpose.msra.mxu0 %v76
    %87 = vmatprep.subr.bf16.mxu0 0
    %88 = vmatpush1.bf16.xpose.msra.mxu0 %v75
    %89 = vmatprep.subr.bf16.mxu0 0
    %90 = vmatpush1.bf16.xpose.msra.mxu0 %v74
    %91 = vmatprep.subr.bf16.mxu0 0
    %92 = vmatpush1.bf16.xpose.msra.mxu0 %v73
    %93 = vmatprep.subr.bf16.mxu0 0
    %94 = vmatpush1.bf16.xpose.msra.mxu0 %v72
    %95 = vmatprep.subr.bf16.mxu0 0
    %96 = vmatpush1.bf16.xpose.msra.mxu0 %v71
    %97 = vmatprep.subr.bf16.mxu0 0
    %98 = vmatpush1.bf16.xpose.msra.mxu0 %v70
    %99 = vmatprep.subr.bf16.mxu0 0
    %100 = vmatpush1.bf16.xpose.msra.mxu0 %v69
    %101 = vmatprep.subr.bf16.mxu0 0
    %102 = vmatpush2.bf16.xpose.msra.mxu0 0
    %103 = vmatprep.subr.bf16.mxu0 0
    %104 = vmatpush2.bf16.xpose.msra.mxu0 0
    %105 = vmatprep.subr.bf16.mxu0 0
    %106 = vmatpush2.bf16.xpose.msra.mxu0 0
    %107 = vmatprep.subr.bf16.mxu0 0
    %108 = vmatpush2.bf16.xpose.msra.mxu0 0
    %109 = vmatprep.subr.bf16.mxu0 0
    %110 = vmatpush2.bf16.xpose.msra.mxu0 0
    %111 = vmatprep.subr.bf16.mxu0 0
    %112 = vmatpush2.bf16.xpose.msra.mxu0 0
    %113 = vmatprep.subr.bf16.mxu0 0
    %114 = vmatpush2.bf16.xpose.msra.mxu0 0
    %115 = vmatprep.subr.bf16.mxu0 0
    %116 = vmatpush2.bf16.xpose.msra.mxu0 0
    %117 = vmatprep.mubr.bf16.mxu0 0
    %118 = vmatmul.mubr.bf16.gmra.mxu0 %v35
    %v119 = vpop.f32.mrf.mxu0
    %v120 = vadd.f32 0.0, %v119
    %v121 = vpop.f32.mrf.mxu0
    %v122 = vpop.f32.mrf.mxu0
    %v123 = vadd.f32 0.0, %v122
    %v124 = vpop.f32.mrf.mxu0
    %125 = vdwg.mxu0
    %126 = vst [vmem:[#allocation2] sm:$0xff] %v120
    %127 = vst [vmem:[#allocation2 + $0x8] sm:$0xff] %v123
    // Predicated region
    $region10: #{dummy_gpt_forward.3} parent=1 // pred_check
      _
    $region11: #{dummy_gpt_forward.3} parent=1 // pred_check_branch
      %129 = sbr.rel (0) target = $region13
    $region12: #{dummy_gpt_forward.3} parent=1 // pred_region
      %s131 = ssub.s32 256, 256
      %132 = vsyncadd [#allocation3], %s131
      %s133 = sshll.u32 [#allocation2], 4
      %s134 = int_to_ptr.vmem [resolvable:$true] %s133
      %139 = dma.vmem_to_hbm [thread:$0]  %s134, 256, %s2, [#allocation3], 128, 128, 8
    $region13: #{dummy_gpt_forward.3} parent=1 // pred_fallthru
      _
    // Predicated region
    $region14: #{dummy_gpt_forward.3} parent=1 // pred_check
      _
    $region15: #{dummy_gpt_forward.3} parent=1 // pred_check_branch
      %141 = sbr.rel (0) target = $region17
    $region16: #{dummy_gpt_forward.3} parent=1 // pred_region
      %142 = dma.done [#allocation3], 256
    $region17: #{dummy_gpt_forward.3} parent=1 // pred_fallthru
      _
    %143 = vsyncpa [#allocation3], 1

</llo_original>
